<compile_context>
chip_gen: v7x
topology: tpu7x:2x2x1
jax: 0.10.0
libtpu: 0.0.40
codegen_flags: <defaults>
</compile_context>

<pallas_src>
import functools

import jax
import jax.numpy as jnp
from jax import lax
from jax.experimental import pallas as pl
from jax.experimental.pallas import tpu as pltpu


def _round_up(n, m):
    return ((n + m - 1) // m) * m


_UNROLL_MAX_LAYERS = 4  # static unroll up to here; lax.fori_loop above


# ----------------------------------------------------------------------------
# Fused kernel: whole MLP in one pallas_call, activations never leave VMEM.
# ----------------------------------------------------------------------------
def _make_fused_mlp_kernel(num_layers):
    def kernel(x_ref, w_ref, b_ref, o_ref):
        # x_ref: (TILE_B, Fmax) f32    w_ref: (L, Fmax, Fmax) bf16
        # b_ref: (L, 1, Fmax)   f32    o_ref: (TILE_B, Fmax)  f32
        def layer(l, act):
            # bf16 MXU matmul with f32 accumulation; bias add + ReLU in f32.
            y = b_ref[l] + jnp.dot(act.astype(jnp.bfloat16), w_ref[l],
                                   preferred_element_type=jnp.float32)
            return jnp.maximum(y, 0.0)          # ReLU after EVERY layer (incl. fc11)

        act = x_ref[...]
        if num_layers <= _UNROLL_MAX_LAYERS:
            for l in range(num_layers):          # static unroll for tiny L
                act = layer(l, act)
        else:
            # fori_loop bounds live ranges / vreg pressure when L approaches 11
            act = lax.fori_loop(0, num_layers, layer, act)
        o_ref[...] = act.astype(o_ref.dtype)
    return kernel


def _fused_mlp(x_pad, w_stack, b_stack, *, tile_b):
    """One pallas_call for the whole layer stack.  Inputs already padded.

    Grid is over batch tiles (parallel -> sharded across v7x's two TCs);
    weight/bias stacks have a constant index_map so they are fetched once
    and stay resident in VMEM across the whole grid.
    """
    B_pad, Fmax = x_pad.shape
    L = w_stack.shape[0]
    grid = (B_pad // tile_b,)

    flops = 2 * B_pad * Fmax * Fmax * L
    bytes_accessed = int(4 * x_pad.size + 2 * w_stack.size + 4 * b_stack.size
                         + 4 * B_pad * Fmax)
    # VMEM budget: resident bf16 weight stack + f32 bias stack + double-buffered
    # f32 x/out tiles, with headroom.  Clamp to sane scoped-VMEM limits.
    vmem_bytes = int(1.5 * (2 * w_stack.size + 4 * b_stack.size
                            + 2 * 2 * 4 * tile_b * Fmax)) + (8 << 20)
    vmem_bytes = min(max(vmem_bytes, 32 << 20), 120 << 20)

    return pl.pallas_call(
        _make_fused_mlp_kernel(L),
        out_shape=jax.ShapeDtypeStruct((B_pad, Fmax), jnp.float32),
        grid=grid,
        in_specs=[
            pl.BlockSpec((tile_b, Fmax), lambda i: (i, 0)),
            pl.BlockSpec((L, Fmax, Fmax), lambda i: (0, 0, 0)),   # resident weights
            pl.BlockSpec((L, 1, Fmax), lambda i: (0, 0, 0)),      # resident biases
        ],
        out_specs=pl.BlockSpec((tile_b, Fmax), lambda i: (i, 0)),
        compiler_params=pltpu.CompilerParams(
            dimension_semantics=("parallel",),
            vmem_limit_bytes=vmem_bytes),
        cost_estimate=pl.CostEstimate(
            flops=flops, transcendentals=0, bytes_accessed=bytes_accessed),
    )(x_pad, w_stack, b_stack)
    # TODO(synk): once L*Fmax*Fmax*2 bytes approaches ~20-30 MiB (e.g. v7x's
    # 64 MiB VMEM with connections>=1024), switch to a grid axis over layers
    # with a Buffered(2-3) weight BlockSpec and a VMEM accumulator scratch
    # (pl.when init/finalize) instead of the whole-stack-resident weights.


# ----------------------------------------------------------------------------
# Parameter construction (matches torch.nn.Linear default init) and packing.
# ----------------------------------------------------------------------------
def init_linear_params(key, fan_in, fan_out):
    kw, kb = jax.random.split(key)
    bound = 1.0 / jnp.sqrt(jnp.asarray(fan_in, jnp.float32))
    # stored as [fan_in, fan_out] (transposed vs torch's [out, in]) for x @ W
    w = jax.random.uniform(kw, (fan_in, fan_out), jnp.float32, -bound, bound)
    b = jax.random.uniform(kb, (fan_out,), jnp.float32, -bound, bound)
    return w, b


def make_net_linear_params(key, input_size=10, output_size=10,
                           hidden_layers=0, connections=256):
    """Builds the same layer stack as Net_Linear.__init__ (fc1..fc10, fc11)."""
    params = []
    if hidden_layers > 0:
        key, sub = jax.random.split(key)
        params.append(init_linear_params(sub, input_size, connections))    # fc1
        for _ in range(min(hidden_layers, 10) - 1):                        # fc2..fc10
            key, sub = jax.random.split(key)
            params.append(init_linear_params(sub, connections, connections))
        key, sub = jax.random.split(key)
        params.append(init_linear_params(sub, connections, output_size))   # fc11
    else:
        key, sub = jax.random.split(key)
        params.append(init_linear_params(sub, input_size, output_size))    # fc11
    return params


def pack_params(params):
    """Zero-pad all layers to a uniform [L, Fmax, Fmax] bf16 / [L, 1, Fmax] f32 stack.

    Done once at setup time (not per forward call).  Padding is inert: padded
    weight rows/cols and bias entries are zero and ReLU(0)=0, so padded
    activation lanes stay zero layer after layer.
    """
    fmax = 128   # lane-aligned; 256-alignment only pays when `connections` >= 256
    for (w, _) in params:
        fmax = max(fmax, _round_up(w.shape[0], 128), _round_up(w.shape[1], 128))
    L = len(params)
    w_stack = jnp.zeros((L, fmax, fmax), jnp.bfloat16)   # bf16 -> MXU-native, 2x less VMEM
    b_stack = jnp.zeros((L, 1, fmax), jnp.float32)       # bias stays f32 (VPU add in f32)
    for l, (w, b) in enumerate(params):
        fi, fo = w.shape
        w_stack = w_stack.at[l, :fi, :fo].set(w.astype(jnp.bfloat16))
        b_stack = b_stack.at[l, 0, :fo].set(b)
    return w_stack, b_stack


# ----------------------------------------------------------------------------
# Forward pass.
# ----------------------------------------------------------------------------
@functools.partial(jax.jit, static_argnames=("output_size",))
def net_linear_forward(x, w_stack, b_stack, *, output_size):
    B, F_in = x.shape
    Fmax = w_stack.shape[1]
    # Tiny batches pad only to 8 sublanes; real batches get >=128-row tiles so
    # the MXU's 128/256 rows are filled and the grid can shard across TCs.
    if B <= 8:
        tile_b = 8
    else:
        tile_b = min(256, _round_up(B, 128))
    B_pad = _round_up(B, tile_b)
    x_pad = jnp.zeros((B_pad, Fmax), jnp.float32).at[:B, :F_in].set(
        x.astype(jnp.float32))
    out_pad = _fused_mlp(x_pad, w_stack, b_stack, tile_b=tile_b)
    return out_pad[:B, :output_size]


if __name__ == "__main__":
    # Small, deterministic config consistent with the module's forward:
    # batch=8, input_size=10, hidden_layers=2, connections=32, output_size=10
    B = 8
    INPUT_SIZE = 10
    OUTPUT_SIZE = 10
    HIDDEN_LAYERS = 2
    CONNECTIONS = 32

    key = jax.random.PRNGKey(0)
    kx, kp = jax.random.split(key)

    x = jax.random.normal(kx, (B, INPUT_SIZE), jnp.float32)
    params = make_net_linear_params(
        kp,
        input_size=INPUT_SIZE,
        output_size=OUTPUT_SIZE,
        hidden_layers=HIDDEN_LAYERS,
        connections=CONNECTIONS,
    )
    w_stack, b_stack = pack_params(params)   # pad/stack once, outside the jit

    y = net_linear_forward(x, w_stack, b_stack, output_size=OUTPUT_SIZE)
    jax.block_until_ready(y)

    # Reference with the SAME numerics as the kernel: bf16 matmul inputs,
    # f32 accumulation, f32 bias add, ReLU after every layer (incl. fc11).
    ref = x.astype(jnp.float32)
    for (w, b) in params:
        ref = jnp.maximum(
            jnp.dot(ref.astype(jnp.bfloat16), w.astype(jnp.bfloat16),
                    preferred_element_type=jnp.float32) + b, 0.0)

    # Looser sanity check against the pure-f32 reference too.
    ref_f32 = x.astype(jnp.float32)
    for (w, b) in params:
        ref_f32 = jnp.maximum(ref_f32 @ w + b, 0.0)

    assert y.shape == (B, OUTPUT_SIZE)
    assert jnp.all(jnp.isfinite(y))
    assert jnp.allclose(y, ref, atol=1e-3, rtol=1e-3)
    assert jnp.allclose(y, ref_f32, atol=5e-2, rtol=5e-2)

    print("KERNEL_OK")
</pallas_src>

<mosaic_0001>
module attributes {stable_mosaic.version = 11 : i64} {
  func.func @kernel(%arg0: i32, %arg1: memref<8x128xf32, #tpu.memory_space<vmem>>, %arg2: memref<3x128x128xbf16, #tpu.memory_space<vmem>>, %arg3: memref<3x1x128xf32, #tpu.memory_space<vmem>>, %arg4: memref<8x128xf32, #tpu.memory_space<vmem>>) attributes {dimension_semantics = [#tpu.dimension_semantics<parallel>], iteration_bounds = array<i64: 1>, scalar_prefetch = 0 : i64, scratch_operands = 0 : i64, tpu.core_type = #tpu.core_type<tc>, window_params = [{transform_indices = @transform_0, window_bounds = array<i64: 8, 128>}, {pipeline_mode = #tpu.pipeline_mode<synchronous>, transform_indices = @transform_1, window_bounds = array<i64: 3, 128, 128>}, {pipeline_mode = #tpu.pipeline_mode<synchronous>, transform_indices = @transform_2, window_bounds = array<i64: 3, 1, 128>}, {transform_indices = @transform_3, window_bounds = array<i64: 8, 128>}]} {
    %c0 = arith.constant 0 : index
    %c0_0 = arith.constant 0 : index
    %0 = vector.load %arg1[%c0, %c0_0] : memref<8x128xf32, #tpu.memory_space<vmem>>, vector<8x128xf32>
    %c0_1 = arith.constant 0 : index
    %c0_2 = arith.constant 0 : index
    %c0_3 = arith.constant 0 : index
    %1 = vector.load %arg3[%c0_1, %c0_2, %c0_3] : memref<3x1x128xf32, #tpu.memory_space<vmem>>, vector<1x1x128xf32>
    %2 = vector.shape_cast %1 : vector<1x1x128xf32> to vector<1x128xf32>
    %3 = arith.truncf %0 : vector<8x128xf32> to vector<8x128xbf16>
    %c0_4 = arith.constant 0 : index
    %c0_5 = arith.constant 0 : index
    %c0_6 = arith.constant 0 : index
    %4 = vector.load %arg2[%c0_4, %c0_5, %c0_6] : memref<3x128x128xbf16, #tpu.memory_space<vmem>>, vector<1x128x128xbf16>
    %5 = vector.shape_cast %4 : vector<1x128x128xbf16> to vector<128x128xbf16>
    %cst = arith.constant dense<0.000000e+00> : vector<8x128xf32>
    %6 = tpu.matmul %3, %5, %cst {dimension_numbers = #tpu.dot_dimension_numbers<[1], [0], [0], [1], [0, 0, 1, 1], [], []>} : vector<8x128xbf16>, vector<128x128xbf16>, vector<8x128xf32> -> vector<8x128xf32>
    %7 = vector.broadcast %2 : vector<1x128xf32> to vector<8x128xf32>
    %8 = arith.addf %7, %6 : vector<8x128xf32>
    %cst_7 = arith.constant 0.000000e+00 : f32
    %9 = vector.broadcast %cst_7 : f32 to vector<8x128xf32>
    %10 = arith.maximumf %8, %9 : vector<8x128xf32>
    %c1 = arith.constant 1 : index
    %c0_8 = arith.constant 0 : index
    %c0_9 = arith.constant 0 : index
    %11 = vector.load %arg3[%c1, %c0_8, %c0_9] : memref<3x1x128xf32, #tpu.memory_space<vmem>>, vector<1x1x128xf32>
    %12 = vector.shape_cast %11 : vector<1x1x128xf32> to vector<1x128xf32>
    %13 = arith.truncf %10 : vector<8x128xf32> to vector<8x128xbf16>
    %c1_10 = arith.constant 1 : index
    %c0_11 = arith.constant 0 : index
    %c0_12 = arith.constant 0 : index
    %14 = vector.load %arg2[%c1_10, %c0_11, %c0_12] : memref<3x128x128xbf16, #tpu.memory_space<vmem>>, vector<1x128x128xbf16>
    %15 = vector.shape_cast %14 : vector<1x128x128xbf16> to vector<128x128xbf16>
    %cst_13 = arith.constant dense<0.000000e+00> : vector<8x128xf32>
    %16 = tpu.matmul %13, %15, %cst_13 {dimension_numbers = #tpu.dot_dimension_numbers<[1], [0], [0], [1], [0, 0, 1, 1], [], []>} : vector<8x128xbf16>, vector<128x128xbf16>, vector<8x128xf32> -> vector<8x128xf32>
    %17 = vector.broadcast %12 : vector<1x128xf32> to vector<8x128xf32>
    %18 = arith.addf %17, %16 : vector<8x128xf32>
    %cst_14 = arith.constant 0.000000e+00 : f32
    %19 = vector.broadcast %cst_14 : f32 to vector<8x128xf32>
    %20 = arith.maximumf %18, %19 : vector<8x128xf32>
    %c2 = arith.constant 2 : index
    %c0_15 = arith.constant 0 : index
    %c0_16 = arith.constant 0 : index
    %21 = vector.load %arg3[%c2, %c0_15, %c0_16] : memref<3x1x128xf32, #tpu.memory_space<vmem>>, vector<1x1x128xf32>
    %22 = vector.shape_cast %21 : vector<1x1x128xf32> to vector<1x128xf32>
    %23 = arith.truncf %20 : vector<8x128xf32> to vector<8x128xbf16>
    %c2_17 = arith.constant 2 : index
    %c0_18 = arith.constant 0 : index
    %c0_19 = arith.constant 0 : index
    %24 = vector.load %arg2[%c2_17, %c0_18, %c0_19] : memref<3x128x128xbf16, #tpu.memory_space<vmem>>, vector<1x128x128xbf16>
    %25 = vector.shape_cast %24 : vector<1x128x128xbf16> to vector<128x128xbf16>
    %cst_20 = arith.constant dense<0.000000e+00> : vector<8x128xf32>
    %26 = tpu.matmul %23, %25, %cst_20 {dimension_numbers = #tpu.dot_dimension_numbers<[1], [0], [0], [1], [0, 0, 1, 1], [], []>} : vector<8x128xbf16>, vector<128x128xbf16>, vector<8x128xf32> -> vector<8x128xf32>
    %27 = vector.broadcast %22 : vector<1x128xf32> to vector<8x128xf32>
    %28 = arith.addf %27, %26 : vector<8x128xf32>
    %cst_21 = arith.constant 0.000000e+00 : f32
    %29 = vector.broadcast %cst_21 : f32 to vector<8x128xf32>
    %30 = arith.maximumf %28, %29 : vector<8x128xf32>
    %c0_22 = arith.constant 0 : index
    %c0_23 = arith.constant 0 : index
    %31 = vector.load %arg4[%c0_22, %c0_23] : memref<8x128xf32, #tpu.memory_space<vmem>>, vector<8x128xf32>
    tpu.vector_store %arg4[%c0_22, %c0_23], %30 {strides = array<i32>} : memref<8x128xf32, #tpu.memory_space<vmem>>, vector<8x128xf32>,
    return
  }
  func.func @transform_0(%arg0: i32) -> (i32, i32) {
    %c0_i32 = arith.constant 0 : i32
    %c0_i32_0 = arith.constant 0 : i32
    return %arg0, %c0_i32 : i32, i32
  }
  func.func @transform_1(%arg0: i32) -> (i32, i32, i32) {
    %c0_i32 = arith.constant 0 : i32
    %c0_i32_0 = arith.constant 0 : i32
    %c0_i32_1 = arith.constant 0 : i32
    %c0_i32_2 = arith.constant 0 : i32
    return %c0_i32, %c0_i32_0, %c0_i32_1 : i32, i32, i32
  }
  func.func @transform_2(%arg0: i32) -> (i32, i32, i32) {
    %c0_i32 = arith.constant 0 : i32
    %c0_i32_0 = arith.constant 0 : i32
    %c0_i32_1 = arith.constant 0 : i32
    %c0_i32_2 = arith.constant 0 : i32
    return %c0_i32, %c0_i32_0, %c0_i32_1 : i32, i32, i32
  }
  func.func @transform_3(%arg0: i32) -> (i32, i32) {
    %c0_i32 = arith.constant 0 : i32
    %c0_i32_0 = arith.constant 0 : i32
    return %arg0, %c0_i32 : i32, i32
  }
}

</mosaic_0001>

<llo_original>
// kernel: net_linear_forward.1
$region0: #{net_linear_forward.1}
  #allocation0 [shape = 'u32[]', space=smem, size = 0x4, offset = 0x4, fixed_abs, tag = 'smem constant byte address 0x4 - core index']
  #allocation1 [shape = 'u32[144,128]{1,0:T(1,128)}', space=vmem, size = 0x12000, scoped, tag = 'internal scratch']
  %s0 = inlined_call_operand.vmem [shape: f32[8,128], index: 0, kind: input, shape index: {}]
  %s1 = inlined_call_operand.hbm [shape: bf16[3,128,128], index: 1, kind: input, shape index: {}]
  %s2 = inlined_call_operand.vmem [shape: f32[3,1,128], index: 2, kind: input, shape index: {}]
  %s3 = inlined_call_operand.hbm [shape: f32[8,128], index: 3, kind: output, shape index: {}]
  %s4 = sld [smem:[#allocation0]]
  $region26: #{net_linear_forward.1} parent=0
    _
  %s6 = ssub.s32 1, %s4
  %s7 = scalar_select 0, %s6, %s4
  $region1: #{net_linear_forward.1} parent=0
    #allocation2 [shape = 'u8[98304]{0}', space=vmem, size = 0x18000, scoped, tag = 'input window, operand 1, single buffered']
    #allocation3 [shape = 's32[1]{0}', space=sflag, size = 0x4, scoped, tag = 'scoped memory for net_linear_forward.1']
    #allocation4 [shape = 's32[1]{0}', space=sflag, size = 0x4, scoped, tag = 'scoped memory for net_linear_forward.1']
    #allocation5 [shape = 'u8[4096]{0}', space=vmem, size = 0x1000, scoped, tag = 'output window, operand 0, single buffered']
    %8 = vsyncpa [#allocation3], 0
    %9 = vsyncpa [#allocation4], 0
    // Predicated region
    $region2: #{net_linear_forward.1} parent=1 // pred_check
      _
    $region3: #{net_linear_forward.1} parent=1 // pred_check_branch
      %11 = sbr.rel (0) target = $region5
    $region4: #{net_linear_forward.1} parent=1 // pred_region
      _
    $region5: #{net_linear_forward.1} parent=1 // pred_fallthru
      _
    // Predicated region
    $region6: #{net_linear_forward.1} parent=1 // pred_check
      _
    $region7: #{net_linear_forward.1} parent=1 // pred_check_branch
      %13 = sbr.rel (0) target = $region9
    $region8: #{net_linear_forward.1} parent=1 // pred_region
      %s15 = ssub.s32 3072, 3072
      %16 = vsyncadd [#allocation3], %s15
      %s17 = sshll.u32 [#allocation2], 4
      %s18 = int_to_ptr.vmem [resolvable:$true] %s17
      %23 = dma.hbm_to_vmem [thread:$0]  %s1, 3072, %s18, [#allocation3], 64, 64, 4
    $region9: #{net_linear_forward.1} parent=1 // pred_fallthru
      _
    // Predicated region
    $region10: #{net_linear_forward.1} parent=1 // pred_check
      _
    $region11: #{net_linear_forward.1} parent=1 // pred_check_branch
      %25 = sbr.rel (0) target = $region13
    $region12: #{net_linear_forward.1} parent=1 // pred_region
      _
    $region13: #{net_linear_forward.1} parent=1 // pred_fallthru
      _
    // Predicated region
    $region14: #{net_linear_forward.1} parent=1 // pred_check
      _
    $region15: #{net_linear_forward.1} parent=1 // pred_check_branch
      %27 = sbr.rel (0) target = $region17
    $region16: #{net_linear_forward.1} parent=1 // pred_region
      %28 = dma.done [#allocation3], 3072
    $region17: #{net_linear_forward.1} parent=1 // pred_fallthru
      _
    %v30 = vld [vmem:[%s0] sm:$0xff]
    %v31 = vld [vmem:[%s2] sm:$0x1]
    %v32 = vpack.c.bf16 %v30, %v30
    %v33 = vld [vmem:[#allocation2] sm:$0xf]
    %v34 = vld [vmem:[#allocation2 + $0x4] sm:$0xf]
    %v35 = vld [vmem:[#allocation2 + $0x8] sm:$0xf]
    %v36 = vld [vmem:[#allocation2 + $0xc] sm:$0xf]
    %v37 = vld [vmem:[#allocation2 + $0x10] sm:$0xf]
    %v38 = vld [vmem:[#allocation2 + $0x14] sm:$0xf]
    %v39 = vld [vmem:[#allocation2 + $0x18] sm:$0xf]
    %v40 = vld [vmem:[#allocation2 + $0x1c] sm:$0xf]
    %v41 = vld [vmem:[#allocation2 + $0x20] sm:$0xf]
    %v42 = vld [vmem:[#allocation2 + $0x24] sm:$0xf]
    %v43 = vld [vmem:[#allocation2 + $0x28] sm:$0xf]
    %v44 = vld [vmem:[#allocation2 + $0x2c] sm:$0xf]
    %v45 = vld [vmem:[#allocation2 + $0x30] sm:$0xf]
    %v46 = vld [vmem:[#allocation2 + $0x34] sm:$0xf]
    %v47 = vld [vmem:[#allocation2 + $0x38] sm:$0xf]
    %v48 = vld [vmem:[#allocation2 + $0x3c] sm:$0xf]
    %v65 = vunpack.c.l.b16 %v33
    %v66 = vunpack.c.l.b16 %v34
    %v67 = vunpack.c.l.b16 %v35
    %v68 = vunpack.c.l.b16 %v36
    %v69 = vunpack.c.l.b16 %v37
    %v70 = vunpack.c.l.b16 %v38
    %v71 = vunpack.c.l.b16 %v39
    %v72 = vunpack.c.l.b16 %v40
    %v73 = vunpack.c.l.b16 %v41
    %v74 = vunpack.c.l.b16 %v42
    %v75 = vunpack.c.l.b16 %v43
    %v76 = vunpack.c.l.b16 %v44
    %v77 = vunpack.c.l.b16 %v45
    %v78 = vunpack.c.l.b16 %v46
    %v79 = vunpack.c.l.b16 %v47
    %v80 = vunpack.c.l.b16 %v48
    %v81 = vpack.c.b16 %v66, %v65
    %v82 = vpack.c.b16 %v68, %v67
    %v83 = vpack.c.b16 %v70, %v69
    %v84 = vpack.c.b16 %v72, %v71
    %v85 = vpack.c.b16 %v74, %v73
    %v86 = vpack.c.b16 %v76, %v75
    %v87 = vpack.c.b16 %v78, %v77
    %v88 = vpack.c.b16 %v80, %v79
    %97 = vmatprep.subr.bf16.mxu0 0
    %98 = vmatpush1.bf16.msra.mxu0 %v81
    %99 = vmatprep.subr.bf16.mxu0 0
    %100 = vmatpush1.bf16.msra.mxu0 %v82
    %101 = vmatprep.subr.bf16.mxu0 0
    %102 = vmatpush1.bf16.msra.mxu0 %v83
    %103 = vmatprep.subr.bf16.mxu0 0
    %104 = vmatpush1.bf16.msra.mxu0 %v84
    %105 = vmatprep.subr.bf16.mxu0 0
    %106 = vmatpush1.bf16.msra.mxu0 %v85
    %107 = vmatprep.subr.bf16.mxu0 0
    %108 = vmatpush1.bf16.msra.mxu0 %v86
    %109 = vmatprep.subr.bf16.mxu0 0
    %110 = vmatpush1.bf16.msra.mxu0 %v87
    %111 = vmatprep.subr.bf16.mxu0 0
    %112 = vmatpush1.bf16.msra.mxu0 %v88
    %113 = vmatprep.subr.bf16.mxu0 0
    %114 = vmatpush1.bf16.msra.mxu0 0
    %115 = vmatprep.subr.bf16.mxu0 0
    %116 = vmatpush1.bf16.msra.mxu0 0
    %117 = vmatprep.subr.bf16.mxu0 0
    %118 = vmatpush1.bf16.msra.mxu0 0
    %119 = vmatprep.subr.bf16.mxu0 0
    %120 = vmatpush1.bf16.msra.mxu0 0
    %121 = vmatprep.subr.bf16.mxu0 0
    %122 = vmatpush1.bf16.msra.mxu0 0
    %123 = vmatprep.subr.bf16.mxu0 0
    %124 = vmatpush1.bf16.msra.mxu0 0
    %125 = vmatprep.subr.bf16.mxu0 0
    %126 = vmatpush1.bf16.msra.mxu0 0
    %127 = vmatprep.subr.bf16.mxu0 0
    %128 = vmatpush1.bf16.msra.mxu0 0
    %129 = vmatprep.mubr.bf16.mxu0 0
    %130 = vmatmul.mubr.bf16.gmra.mrb[0].mxu0 %v32
    %v131 = vpop.f32.mrb[0].mxu0
    %v132 = vadd.f32 0.0, %v131
    %v133 = vpop.f32.mrb[0].mxu0
    %v134 = vpop.f32.mrb[0].mxu0
    %v135 = vpop.f32.mrb[0].mxu0
    %136 = vdwg.mxu0
    %v138 = vlaneseq
    %v139 = vshrl.u32 %v138, 7
    %v140 = vsub.s32 0, %v139
    %v141 = vrot.slane %v31, %v140
    %v143 = vadd.f32 %v141, %v132
    %v144 = vmax.f32 %v143, 0.0
    %s145 = scalar_lea.vmem %s2, 1
    %v146 = vld [vmem:[%s145] sm:$0x1]
    %v147 = vpack.c.bf16 %v144, %v144
    %s148 = scalar_lea.vmem [#allocation2], 64
    %v149 = vld [vmem:[%s148] sm:$0xf]
    %v150 = vld [vmem:[%s148 + $0x4] sm:$0xf]
    %v151 = vld [vmem:[%s148 + $0x8] sm:$0xf]
    %v152 = vld [vmem:[%s148 + $0xc] sm:$0xf]
    %v153 = vld [vmem:[%s148 + $0x10] sm:$0xf]
    %v154 = vld [vmem:[%s148 + $0x14] sm:$0xf]
    %v155 = vld [vmem:[%s148 + $0x18] sm:$0xf]
    %v156 = vld [vmem:[%s148 + $0x1c] sm:$0xf]
    %v157 = vld [vmem:[%s148 + $0x20] sm:$0xf]
    %v158 = vld [vmem:[%s148 + $0x24] sm:$0xf]
    %v159 = vld [vmem:[%s148 + $0x28] sm:$0xf]
    %v160 = vld [vmem:[%s148 + $0x2c] sm:$0xf]
    %v161 = vld [vmem:[%s148 + $0x30] sm:$0xf]
    %v162 = vld [vmem:[%s148 + $0x34] sm:$0xf]
    %v163 = vld [vmem:[%s148 + $0x38] sm:$0xf]
    %v164 = vld [vmem:[%s148 + $0x3c] sm:$0xf]
    %v181 = vunpack.c.l.b16 %v149
    %v182 = vunpack.c.l.b16 %v150
    %v183 = vunpack.c.l.b16 %v151
    %v184 = vunpack.c.l.b16 %v152
    %v185 = vunpack.c.l.b16 %v153
    %v186 = vunpack.c.l.b16 %v154
    %v187 = vunpack.c.l.b16 %v155
    %v188 = vunpack.c.l.b16 %v156
    %v189 = vunpack.c.l.b16 %v157
    %v190 = vunpack.c.l.b16 %v158
    %v191 = vunpack.c.l.b16 %v159
    %v192 = vunpack.c.l.b16 %v160
    %v193 = vunpack.c.l.b16 %v161
    %v194 = vunpack.c.l.b16 %v162
    %v195 = vunpack.c.l.b16 %v163
    %v196 = vunpack.c.l.b16 %v164
    %v197 = vpack.c.b16 %v182, %v181
    %v198 = vpack.c.b16 %v184, %v183
    %v199 = vpack.c.b16 %v186, %v185
    %v200 = vpack.c.b16 %v188, %v187
    %v201 = vpack.c.b16 %v190, %v189
    %v202 = vpack.c.b16 %v192, %v191
    %v203 = vpack.c.b16 %v194, %v193
    %v204 = vpack.c.b16 %v196, %v195
    %213 = vmatprep.subr.bf16.mxu0 0
    %214 = vmatpush1.bf16.msra.mxu0 %v197
    %215 = vmatprep.subr.bf16.mxu0 0
    %216 = vmatpush1.bf16.msra.mxu0 %v198
    %217 = vmatprep.subr.bf16.mxu0 0
    %218 = vmatpush1.bf16.msra.mxu0 %v199
    %219 = vmatprep.subr.bf16.mxu0 0
    %220 = vmatpush1.bf16.msra.mxu0 %v200
    %221 = vmatprep.subr.bf16.mxu0 0
    %222 = vmatpush1.bf16.msra.mxu0 %v201
    %223 = vmatprep.subr.bf16.mxu0 0
    %224 = vmatpush1.bf16.msra.mxu0 %v202
    %225 = vmatprep.subr.bf16.mxu0 0
    %226 = vmatpush1.bf16.msra.mxu0 %v203
    %227 = vmatprep.subr.bf16.mxu0 0
    %228 = vmatpush1.bf16.msra.mxu0 %v204
    %229 = vmatprep.subr.bf16.mxu0 0
    %230 = vmatpush1.bf16.msra.mxu0 0
    %231 = vmatprep.subr.bf16.mxu0 0
    %232 = vmatpush1.bf16.msra.mxu0 0
    %233 = vmatprep.subr.bf16.mxu0 0
    %234 = vmatpush1.bf16.msra.mxu0 0
    %235 = vmatprep.subr.bf16.mxu0 0
    %236 = vmatpush1.bf16.msra.mxu0 0
    %237 = vmatprep.subr.bf16.mxu0 0
    %238 = vmatpush1.bf16.msra.mxu0 0
    %239 = vmatprep.subr.bf16.mxu0 0
    %240 = vmatpush1.bf16.msra.mxu0 0
    %241 = vmatprep.subr.bf16.mxu0 0
    %242 = vmatpush1.bf16.msra.mxu0 0
    %243 = vmatprep.subr.bf16.mxu0 0
    %244 = vmatpush1.bf16.msra.mxu0 0
    %245 = vmatprep.mubr.bf16.mxu0 0
    %246 = vmatmul.mubr.bf16.gmra.mrb[0].mxu0 %v147
    %v247 = vpop.f32.mrb[0].mxu0
    %v248 = vadd.f32 0.0, %v247
    %v249 = vpop.f32.mrb[0].mxu0
    %v250 = vpop.f32.mrb[0].mxu0
    %v251 = vpop.f32.mrb[0].mxu0
    %252 = vdwg.mxu0
    %v254 = vlaneseq
    %v255 = vshrl.u32 %v254, 7
    %v256 = vsub.s32 0, %v255
    %v257 = vrot.slane %v146, %v256
    %v259 = vadd.f32 %v257, %v248
    %v260 = vmax.f32 %v259, 0.0
    %s261 = scalar_lea.vmem %s2, 2
    %v262 = vld [vmem:[%s261] sm:$0x1]
    %v263 = vpack.c.bf16 %v260, %v260
    %s264 = scalar_lea.vmem [#allocation2], 128
    %v265 = vld [vmem:[%s264] sm:$0xf]
    %v266 = vld [vmem:[%s264 + $0x4] sm:$0xf]
    %v267 = vld [vmem:[%s264 + $0x8] sm:$0xf]
    %v268 = vld [vmem:[%s264 + $0xc] sm:$0xf]
    %v269 = vld [vmem:[%s264 + $0x10] sm:$0xf]
    %v270 = vld [vmem:[%s264 + $0x14] sm:$0xf]
    %v271 = vld [vmem:[%s264 + $0x18] sm:$0xf]
    %v272 = vld [vmem:[%s264 + $0x1c] sm:$0xf]
    %v273 = vld [vmem:[%s264 + $0x20] sm:$0xf]
    %v274 = vld [vmem:[%s264 + $0x24] sm:$0xf]
    %v275 = vld [vmem:[%s264 + $0x28] sm:$0xf]
    %v276 = vld [vmem:[%s264 + $0x2c] sm:$0xf]
    %v277 = vld [vmem:[%s264 + $0x30] sm:$0xf]
    %v278 = vld [vmem:[%s264 + $0x34] sm:$0xf]
    %v279 = vld [vmem:[%s264 + $0x38] sm:$0xf]
    %v280 = vld [vmem:[%s264 + $0x3c] sm:$0xf]
    %v297 = vunpack.c.l.b16 %v265
    %v298 = vunpack.c.l.b16 %v266
    %v299 = vunpack.c.l.b16 %v267
    %v300 = vunpack.c.l.b16 %v268
    %v301 = vunpack.c.l.b16 %v269
    %v302 = vunpack.c.l.b16 %v270
    %v303 = vunpack.c.l.b16 %v271
    %v304 = vunpack.c.l.b16 %v272
    %v305 = vunpack.c.l.b16 %v273
    %v306 = vunpack.c.l.b16 %v274
    %v307 = vunpack.c.l.b16 %v275
    %v308 = vunpack.c.l.b16 %v276
    %v309 = vunpack.c.l.b16 %v277
    %v310 = vunpack.c.l.b16 %v278
    %v311 = vunpack.c.l.b16 %v279
    %v312 = vunpack.c.l.b16 %v280
    %v313 = vpack.c.b16 %v298, %v297
    %v314 = vpack.c.b16 %v300, %v299
    %v315 = vpack.c.b16 %v302, %v301
    %v316 = vpack.c.b16 %v304, %v303
    %v317 = vpack.c.b16 %v306, %v305
    %v318 = vpack.c.b16 %v308, %v307
    %v319 = vpack.c.b16 %v310, %v309
    %v320 = vpack.c.b16 %v312, %v311
    %329 = vmatprep.subr.bf16.mxu0 0
    %330 = vmatpush1.bf16.msra.mxu0 %v313
    %331 = vmatprep.subr.bf16.mxu0 0
    %332 = vmatpush1.bf16.msra.mxu0 %v314
    %333 = vmatprep.subr.bf16.mxu0 0
    %334 = vmatpush1.bf16.msra.mxu0 %v315
    %335 = vmatprep.subr.bf16.mxu0 0
    %336 = vmatpush1.bf16.msra.mxu0 %v316
    %337 = vmatprep.subr.bf16.mxu0 0
    %338 = vmatpush1.bf16.msra.mxu0 %v317
    %339 = vmatprep.subr.bf16.mxu0 0
    %340 = vmatpush1.bf16.msra.mxu0 %v318
    %341 = vmatprep.subr.bf16.mxu0 0
    %342 = vmatpush1.bf16.msra.mxu0 %v319
    %343 = vmatprep.subr.bf16.mxu0 0
    %344 = vmatpush1.bf16.msra.mxu0 %v320
    %345 = vmatprep.subr.bf16.mxu0 0
    %346 = vmatpush1.bf16.msra.mxu0 0
    %347 = vmatprep.subr.bf16.mxu0 0
    %348 = vmatpush1.bf16.msra.mxu0 0
    %349 = vmatprep.subr.bf16.mxu0 0
    %350 = vmatpush1.bf16.msra.mxu0 0
    %351 = vmatprep.subr.bf16.mxu0 0
    %352 = vmatpush1.bf16.msra.mxu0 0
    %353 = vmatprep.subr.bf16.mxu0 0
    %354 = vmatpush1.bf16.msra.mxu0 0
    %355 = vmatprep.subr.bf16.mxu0 0
    %356 = vmatpush1.bf16.msra.mxu0 0
    %357 = vmatprep.subr.bf16.mxu0 0
    %358 = vmatpush1.bf16.msra.mxu0 0
    %359 = vmatprep.subr.bf16.mxu0 0
    %360 = vmatpush1.bf16.msra.mxu0 0
    %361 = vmatprep.mubr.bf16.mxu0 0
    %362 = vmatmul.mubr.bf16.gmra.mrb[0].mxu0 %v263
    %v363 = vpop.f32.mrb[0].mxu0
    %v364 = vadd.f32 0.0, %v363
    %v365 = vpop.f32.mrb[0].mxu0
    %v366 = vpop.f32.mrb[0].mxu0
    %v367 = vpop.f32.mrb[0].mxu0
    %368 = vdwg.mxu0
    %v370 = vlaneseq
    %v371 = vshrl.u32 %v370, 7
    %v372 = vsub.s32 0, %v371
    %v373 = vrot.slane %v262, %v372
    %v375 = vadd.f32 %v373, %v364
    %v376 = vmax.f32 %v375, 0.0
    %377 = vst [vmem:[#allocation5] sm:$0xff] %v376
    // Predicated region
    $region18: #{net_linear_forward.1} parent=1 // pred_check
      _
    $region19: #{net_linear_forward.1} parent=1 // pred_check_branch
      %379 = sbr.rel (0) target = $region21
    $region20: #{net_linear_forward.1} parent=1 // pred_region
      %s381 = ssub.s32 128, 128
      %382 = vsyncadd [#allocation4], %s381
      %s384 = sshll.u32 [#allocation5], 4
      %s385 = int_to_ptr.vmem [resolvable:$true] %s384
      %387 = dma.vmem_to_hbm [thread:$0]  %s385, 128, %s3, [#allocation4]
    $region21: #{net_linear_forward.1} parent=1 // pred_fallthru
      _
    // Predicated region
    $region22: #{net_linear_forward.1} parent=1 // pred_check
      _
    $region23: #{net_linear_forward.1} parent=1 // pred_check_branch
      %389 = sbr.rel (0) target = $region25
    $region24: #{net_linear_forward.1} parent=1 // pred_region
      %390 = dma.done [#allocation4], 128
    $region25: #{net_linear_forward.1} parent=1 // pred_fallthru
      _
    %391 = vsyncpa [#allocation3], 1
    %392 = vsyncpa [#allocation4], 1

</llo_original>
